<compile_context>
chip_gen: v7x
topology: tpu7x:2x2x1
jax: 0.10.0
libtpu: 0.0.40
codegen_flags: <defaults>
</compile_context>

<pallas_src>
import functools

import jax
import jax.numpy as jnp
from jax.experimental import pallas as pl
from jax.experimental.pallas import tpu as pltpu


def _cdiv(a, b):
    return -(-a // b)


# ---------------------------------------------------------------------------
# Kernels
# ---------------------------------------------------------------------------

def _se_fused_kernel(x_ref, w1t_ref, b1_ref, w2t_ref, b2_ref, o_ref, *, inv_hw):
    """Single-pass SE: a tile of n_b full images resident in VMEM."""
    # Squeeze: global average pool == contiguous trailing-axis reduction,
    # accumulated in f32 and scaled by the constant 1/(H*W).
    pooled = jnp.sum(x_ref[...], axis=-1, dtype=jnp.float32) * inv_hw        # (n_b, C)

    # Excitation fc1 (1x1 conv C -> C_r) + ReLU, batched over the image tile.
    z = jnp.dot(pooled.astype(w1t_ref.dtype), w1t_ref[...],
                preferred_element_type=jnp.float32)
    z = jnp.maximum(z + b1_ref[...], 0.0)                                    # (n_b, C_r)

    # Excitation fc2 (1x1 conv C_r -> C) + Sigmoid.
    a = jnp.dot(z.astype(w2t_ref.dtype), w2t_ref[...],
                preferred_element_type=jnp.float32)
    a = jax.nn.sigmoid(a + b2_ref[...])                                      # (n_b, C)

    # Scale: re-read the resident input block (do NOT keep it live across the
    # reduction) and broadcast the gate over the spatial (lane) axis.
    scale = a.astype(o_ref.dtype).reshape(a.shape[0], a.shape[1], 1)
    o_ref[...] = (x_ref[...] * scale).astype(o_ref.dtype)


def _se_pool_excite_kernel(x_ref, w1t_ref, b1_ref, w2t_ref, b2_ref, gate_ref,
                           acc_ref, *, inv_hw):
    """Two-pass SE, pass 1: pool over spatial tiles; excite on the last tile.

    Grid = (batch, hw_tiles); the spatial axis is the (arbitrary) reduction
    axis; the (1, C, 1) gate block is resident across it."""
    h = pl.program_id(1)

    @pl.when(h == 0)
    def _():
        acc_ref[...] = jnp.zeros_like(acc_ref)

    acc_ref[...] += jnp.sum(x_ref[...], axis=-1, dtype=jnp.float32)          # (1, C)

    @pl.when(h == pl.num_programs(1) - 1)
    def _():
        pooled = acc_ref[...] * inv_hw
        z = jnp.dot(pooled.astype(w1t_ref.dtype), w1t_ref[...],
                    preferred_element_type=jnp.float32)
        z = jnp.maximum(z + b1_ref[...], 0.0)
        a = jnp.dot(z.astype(w2t_ref.dtype), w2t_ref[...],
                    preferred_element_type=jnp.float32)
        a = jax.nn.sigmoid(a + b2_ref[...])                                  # (1, C)
        gate_ref[...] = a.reshape(gate_ref.shape)


def _se_scale_kernel(x_ref, gate_ref, o_ref):
    """Two-pass SE, pass 2: channel-wise rescale of one lane-dense tile."""
    scale = gate_ref[...].astype(o_ref.dtype)                                # (1, C, 1)
    o_ref[...] = (x_ref[...] * scale).astype(o_ref.dtype)


# ---------------------------------------------------------------------------
# Hardware queries & tiling heuristics
# ---------------------------------------------------------------------------

def _vmem_capacity_bytes():
    """Per-core VMEM capacity in bytes; conservative fallback if unavailable."""
    try:
        info = pltpu.get_tpu_info()
        cap = int(getattr(info, "vmem_capacity_bytes", 0))
        if cap > 0:
            return cap
    except Exception:
        pass
    return 64 * 1024 * 1024  # v7x per-core VMEM; safe lower bound everywhere


def _num_tensorcores():
    """TensorCores per device: 2 on megacore chips (v4/v5p/v7x), else 1."""
    try:
        kind = jax.devices()[0].device_kind.lower()
    except Exception:
        return 1
    if any(tag in kind for tag in ("v4", "v5p", "v7", "7x")):
        return 2
    return 1


def _pick_batch_tile(n, per_image_bytes, block_budget_bytes, num_cores):
    """Batch tile n_b: double-buffered in+out blocks must fit the budget.

    Minimize the number of core-rounds (ceil(steps / num_cores)), then take
    the smallest tile achieving it, so dual-core chips get an even split
    instead of one half-idle single-step block, while single-core chips get
    one maximal block when the whole batch fits."""
    max_nb = max(1, min(n, block_budget_bytes // max(4 * per_image_bytes, 1)))
    best_key, best_nb = None, 1
    for nb in range(1, max_nb + 1):
        steps = _cdiv(n, nb)
        rounds = _cdiv(steps, num_cores)
        key = (rounds, nb)
        if best_key is None or key < best_key:
            best_key, best_nb = key, nb
    return best_nb


def _pick_hw_tile(hw, c, itemsize, block_budget_bytes):
    """Spatial tile for the two-pass path: the largest lane-dense (multiple of
    128) divisor of H*W whose double-buffered in+out (1, C, hw_t) blocks fit."""
    divisors = [d for d in range(128, hw, 128) if hw % d == 0]
    if hw % 128 == 0:
        divisors.append(hw)
    if not divisors:
        # TODO(synk): H*W not a multiple of 128 -- fall back to the full
        # spatial extent (padding/masking would be needed to tile it).
        return hw
    fitting = [d for d in divisors if 4 * c * d * itemsize <= block_budget_bytes]
    return max(fitting) if fitting else min(divisors)


# ---------------------------------------------------------------------------
# Wrapper
# ---------------------------------------------------------------------------

def squeeze_excitation_2d(x, w1, b1, w2, b2, *,
                          batch_tile=None, hw_tile=None, force_two_pass=False):
    """SE forward: x * sigmoid(fc2(relu(fc1(mean_hw(x))))).

    x: (N, C, H, W); w1: (C_r, C); b1: (C_r,); w2: (C, C_r); b2: (C,)."""
    N, C, H, W = x.shape
    C_r = w1.shape[0]
    HW = H * W
    dtype = x.dtype
    itemsize = jnp.dtype(dtype).itemsize

    # Lane-dense view: trailing dim H*W (contiguous -> free reshape).
    x3 = x.reshape(N, C, HW)

    # Weights in the input dtype (native bf16 MXU path, half the weight DMA);
    # biases and all accumulation stay f32.  Pre-transposed for row-major
    # (n_b, C) @ (C, C_r) matmuls.
    w1t = jnp.asarray(w1, dtype).T                     # (C, C_r)
    w2t = jnp.asarray(w2, dtype).T                     # (C_r, C)
    b1r = jnp.asarray(b1, jnp.float32).reshape(1, C_r)
    b2r = jnp.asarray(b2, jnp.float32).reshape(1, C)

    num_cores = _num_tensorcores()
    vmem_cap = _vmem_capacity_bytes()
    vmem_limit = int(vmem_cap * 0.8)                   # headroom for compiler scratch

    # Honest VMEM accounting: weight/bias blocks are double-buffered too.
    # TODO(synk): absurdly large C*C_r (weights alone over the limit) would
    # need a channel-tiled excitation; not handled here.
    weight_bytes = 2 * (2 * C * C_r * itemsize + (C + C_r) * 4)
    block_budget = max(vmem_limit - weight_bytes - 4 * 1024 * 1024,
                       2 * 1024 * 1024)

    per_image_bytes = C * HW * itemsize
    inv_hw = 1.0 / float(HW)
    single_block_fits = 4 * per_image_bytes <= block_budget

    if single_block_fits and not force_two_pass:
        # ----- Single fused pass: grid over batch tiles -----
        n_b = batch_tile if batch_tile is not None else _pick_batch_tile(
            N, per_image_bytes, block_budget, num_cores)
        grid = (_cdiv(N, n_b),)   # partial last block allowed (masked writes)

        out3 = pl.pallas_call(
            functools.partial(_se_fused_kernel, inv_hw=inv_hw),
            out_shape=jax.ShapeDtypeStruct((N, C, HW), dtype),
            grid_spec=pltpu.PrefetchScalarGridSpec(
                num_scalar_prefetch=0,
                grid=grid,
                in_specs=[
                    pl.BlockSpec((n_b, C, HW), lambda n: (n, 0, 0)),
                    pl.BlockSpec((C, C_r), lambda n: (0, 0)),
                    pl.BlockSpec((1, C_r), lambda n: (0, 0)),
                    pl.BlockSpec((C_r, C), lambda n: (0, 0)),
                    pl.BlockSpec((1, C), lambda n: (0, 0)),
                ],
                out_specs=pl.BlockSpec((n_b, C, HW), lambda n: (n, 0, 0)),
            ),
            compiler_params=pltpu.CompilerParams(
                dimension_semantics=("parallel",),
                vmem_limit_bytes=vmem_limit,
            ),
        )(x3, w1t, b1r, w2t, b2r)
        return out3.reshape(N, C, H, W)

    # ----- Two-pass fallback: a single image's blocks exceed the budget -----
    hw_t = hw_tile if hw_tile is not None else _pick_hw_tile(
        HW, C, itemsize, block_budget)
    if HW % hw_t:
        # TODO(synk): non-divisor spatial tiles would need lane masking in the
        # pooling reduction; fall back to the full spatial extent.
        hw_t = HW
    grid2 = (N, HW // hw_t)

    # Pass 1: pool over spatial tiles, excite on the last one -> (N, C, 1) gate.
    gate = pl.pallas_call(
        functools.partial(_se_pool_excite_kernel, inv_hw=inv_hw),
        out_shape=jax.ShapeDtypeStruct((N, C, 1), jnp.float32),
        grid_spec=pltpu.PrefetchScalarGridSpec(
            num_scalar_prefetch=0,
            grid=grid2,
            in_specs=[
                pl.BlockSpec((1, C, hw_t), lambda b, h: (b, 0, h)),
                pl.BlockSpec((C, C_r), lambda b, h: (0, 0)),
                pl.BlockSpec((1, C_r), lambda b, h: (0, 0)),
                pl.BlockSpec((C_r, C), lambda b, h: (0, 0)),
                pl.BlockSpec((1, C), lambda b, h: (0, 0)),
            ],
            out_specs=pl.BlockSpec((1, C, 1), lambda b, h: (b, 0, 0)),
            scratch_shapes=[pltpu.VMEM((1, C), jnp.float32)],
        ),
        compiler_params=pltpu.CompilerParams(
            dimension_semantics=("parallel", "arbitrary"),
            vmem_limit_bytes=vmem_limit,
        ),
    )(x3, w1t, b1r, w2t, b2r)

    # Pass 2: channel-wise rescale, fully parallel over (batch, spatial tiles).
    out3 = pl.pallas_call(
        _se_scale_kernel,
        out_shape=jax.ShapeDtypeStruct((N, C, HW), dtype),
        grid_spec=pltpu.PrefetchScalarGridSpec(
            num_scalar_prefetch=0,
            grid=grid2,
            in_specs=[
                pl.BlockSpec((1, C, hw_t), lambda b, h: (b, 0, h)),
                pl.BlockSpec((1, C, 1), lambda b, h: (b, 0, 0)),
            ],
            out_specs=pl.BlockSpec((1, C, hw_t), lambda b, h: (b, 0, h)),
        ),
        compiler_params=pltpu.CompilerParams(
            dimension_semantics=("parallel", "parallel"),
            vmem_limit_bytes=vmem_limit,
        ),
    )(x3, gate)
    return out3.reshape(N, C, H, W)


# ---------------------------------------------------------------------------
# Pure-JAX reference (mirrors the PyTorch module)
# ---------------------------------------------------------------------------

def _reference(x, w1, b1, w2, b2):
    y = jnp.mean(x.astype(jnp.float32), axis=(2, 3), keepdims=True)          # (N,C,1,1)
    y = jnp.einsum("ncij,rc->nrij", y, w1) + b1[None, :, None, None]
    y = jnp.maximum(y, 0.0)
    y = jnp.einsum("nrij,cr->ncij", y, w2) + b2[None, :, None, None]
    y = jax.nn.sigmoid(y)
    return (x * y).astype(x.dtype)


if __name__ == "__main__":
    # SqueezeExcitation2d(input_channel=4, reduction_ratio=1)
    N, C, H, W = 2, 4, 16, 16
    reduction_ratio = 1
    C_r = C // reduction_ratio

    key = jax.random.PRNGKey(0)
    kx, k1, k2, k3, k4 = jax.random.split(key, 5)

    x = jax.random.normal(kx, (N, C, H, W), dtype=jnp.float32)
    # Conv2d 1x1 weights collapsed to 2-D.
    w1 = 0.5 * jax.random.normal(k1, (C_r, C), dtype=jnp.float32)   # s.weight (C_r,C,1,1)
    b1 = 0.1 * jax.random.normal(k2, (C_r,), dtype=jnp.float32)     # s.bias
    w2 = 0.5 * jax.random.normal(k3, (C, C_r), dtype=jnp.float32)   # e.weight (C,C_r,1,1)
    b2 = 0.1 * jax.random.normal(k4, (C,), dtype=jnp.float32)       # e.bias

    ref = _reference(x, w1, b1, w2, b2)

    # 1) Fused single-pass path (auto tile selection).
    out = jax.block_until_ready(squeeze_excitation_2d(x, w1, b1, w2, b2))
    assert out.shape == (N, C, H, W)
    assert jnp.allclose(out, ref, atol=1e-5, rtol=1e-5)

    # 2) Fused path with a forced batch tile on N=3 -> exercises the
    #    non-divisor (partial last block) batch tiling.
    xb3 = jax.random.normal(kx, (3, C, H, W), dtype=jnp.float32)
    ref_b3 = _reference(xb3, w1, b1, w2, b2)
    out_b3 = jax.block_until_ready(
        squeeze_excitation_2d(xb3, w1, b1, w2, b2, batch_tile=2))
    assert jnp.allclose(out_b3, ref_b3, atol=1e-5, rtol=1e-5)

    # 3) Two-pass (pool/excite + scale) fallback path with spatial tiling.
    out_tp = jax.block_until_ready(
        squeeze_excitation_2d(x, w1, b1, w2, b2, force_two_pass=True, hw_tile=128))
    assert jnp.allclose(out_tp, ref, atol=1e-5, rtol=1e-5)

    print("KERNEL_OK")
</pallas_src>

<mosaic_0001>
module attributes {stable_mosaic.version = 11 : i64} {
  func.func @_se_fused_kernel(%arg0: i32, %arg1: memref<2x4x256xf32, #tpu.memory_space<vmem>>, %arg2: memref<4x4xf32, #tpu.memory_space<vmem>>, %arg3: memref<1x4xf32, #tpu.memory_space<vmem>>, %arg4: memref<4x4xf32, #tpu.memory_space<vmem>>, %arg5: memref<1x4xf32, #tpu.memory_space<vmem>>, %arg6: memref<2x4x256xf32, #tpu.memory_space<vmem>>) attributes {dimension_semantics = [#tpu.dimension_semantics<parallel>], iteration_bounds = array<i64: 1>, scalar_prefetch = 0 : i64, scratch_operands = 0 : i64, tpu.core_type = #tpu.core_type<tc>, window_params = [{transform_indices = @transform_0, window_bounds = array<i64: 2, 4, 256>}, {pipeline_mode = #tpu.pipeline_mode<synchronous>, transform_indices = @transform_1, window_bounds = array<i64: 4, 4>}, {pipeline_mode = #tpu.pipeline_mode<synchronous>, transform_indices = @transform_2, window_bounds = array<i64: 1, 4>}, {pipeline_mode = #tpu.pipeline_mode<synchronous>, transform_indices = @transform_3, window_bounds = array<i64: 4, 4>}, {pipeline_mode = #tpu.pipeline_mode<synchronous>, transform_indices = @transform_4, window_bounds = array<i64: 1, 4>}, {transform_indices = @transform_5, window_bounds = array<i64: 2, 4, 256>}]} {
    %c0 = arith.constant 0 : index
    %c0_0 = arith.constant 0 : index
    %c0_1 = arith.constant 0 : index
    %0 = vector.load %arg1[%c0, %c0_0, %c0_1] : memref<2x4x256xf32, #tpu.memory_space<vmem>>, vector<2x4x256xf32>
    %cst = arith.constant dense<0.000000e+00> : vector<2x4xf32>
    %1 = vector.multi_reduction <add>, %0, %cst [2] : vector<2x4x256xf32> to vector<2x4xf32>
    %cst_2 = arith.constant 3.906250e-03 : f32
    %2 = vector.broadcast %cst_2 : f32 to vector<2x4xf32>
    %3 = arith.mulf %1, %2 : vector<2x4xf32>
    %c0_3 = arith.constant 0 : index
    %c0_4 = arith.constant 0 : index
    %4 = vector.load %arg2[%c0_3, %c0_4] : memref<4x4xf32, #tpu.memory_space<vmem>>, vector<4x4xf32>
    %cst_5 = arith.constant dense<0.000000e+00> : vector<2x4xf32>
    %5 = tpu.matmul %3, %4, %cst_5 {dimension_numbers = #tpu.dot_dimension_numbers<[1], [0], [0], [1], [0, 0, 1, 1], [], []>} : vector<2x4xf32>, vector<4x4xf32>, vector<2x4xf32> -> vector<2x4xf32>
    %c0_6 = arith.constant 0 : index
    %c0_7 = arith.constant 0 : index
    %6 = vector.load %arg3[%c0_6, %c0_7] : memref<1x4xf32, #tpu.memory_space<vmem>>, vector<1x4xf32>
    %7 = vector.broadcast %6 : vector<1x4xf32> to vector<2x4xf32>
    %8 = arith.addf %5, %7 : vector<2x4xf32>
    %cst_8 = arith.constant 0.000000e+00 : f32
    %9 = vector.broadcast %cst_8 : f32 to vector<2x4xf32>
    %10 = arith.maximumf %8, %9 : vector<2x4xf32>
    %c0_9 = arith.constant 0 : index
    %c0_10 = arith.constant 0 : index
    %11 = vector.load %arg4[%c0_9, %c0_10] : memref<4x4xf32, #tpu.memory_space<vmem>>, vector<4x4xf32>
    %cst_11 = arith.constant dense<0.000000e+00> : vector<2x4xf32>
    %12 = tpu.matmul %10, %11, %cst_11 {dimension_numbers = #tpu.dot_dimension_numbers<[1], [0], [0], [1], [0, 0, 1, 1], [], []>} : vector<2x4xf32>, vector<4x4xf32>, vector<2x4xf32> -> vector<2x4xf32>
    %c0_12 = arith.constant 0 : index
    %c0_13 = arith.constant 0 : index
    %13 = vector.load %arg5[%c0_12, %c0_13] : memref<1x4xf32, #tpu.memory_space<vmem>>, vector<1x4xf32>
    %14 = vector.broadcast %13 : vector<1x4xf32> to vector<2x4xf32>
    %15 = arith.addf %12, %14 : vector<2x4xf32>
    %16 = arith.negf %15 : vector<2x4xf32>
    %17 = math.exp %16 : vector<2x4xf32>
    %cst_14 = arith.constant 1.000000e+00 : f32
    %18 = vector.broadcast %cst_14 : f32 to vector<2x4xf32>
    %19 = arith.addf %18, %17 : vector<2x4xf32>
    %20 = arith.divf %18, %19 : vector<2x4xf32>
    %21 = vector.shape_cast %20 : vector<2x4xf32> to vector<2x4x1xf32>
    %c0_15 = arith.constant 0 : index
    %c0_16 = arith.constant 0 : index
    %c0_17 = arith.constant 0 : index
    %22 = vector.load %arg1[%c0_15, %c0_16, %c0_17] : memref<2x4x256xf32, #tpu.memory_space<vmem>>, vector<2x4x256xf32>
    %23 = vector.broadcast %21 : vector<2x4x1xf32> to vector<2x4x256xf32>
    %24 = arith.mulf %22, %23 : vector<2x4x256xf32>
    %c0_18 = arith.constant 0 : index
    %c0_19 = arith.constant 0 : index
    %c0_20 = arith.constant 0 : index
    %25 = vector.load %arg6[%c0_18, %c0_19, %c0_20] : memref<2x4x256xf32, #tpu.memory_space<vmem>>, vector<2x4x256xf32>
    tpu.vector_store %arg6[%c0_18, %c0_19, %c0_20], %24 {strides = array<i32>} : memref<2x4x256xf32, #tpu.memory_space<vmem>>, vector<2x4x256xf32>,
    return
  }
  func.func @transform_0(%arg0: i32) -> (i32, i32, i32) {
    %c0_i32 = arith.constant 0 : i32
    %c0_i32_0 = arith.constant 0 : i32
    %c0_i32_1 = arith.constant 0 : i32
    return %arg0, %c0_i32, %c0_i32_0 : i32, i32, i32
  }
  func.func @transform_1(%arg0: i32) -> (i32, i32) {
    %c0_i32 = arith.constant 0 : i32
    %c0_i32_0 = arith.constant 0 : i32
    %c0_i32_1 = arith.constant 0 : i32
    return %c0_i32, %c0_i32_0 : i32, i32
  }
  func.func @transform_2(%arg0: i32) -> (i32, i32) {
    %c0_i32 = arith.constant 0 : i32
    %c0_i32_0 = arith.constant 0 : i32
    %c0_i32_1 = arith.constant 0 : i32
    return %c0_i32, %c0_i32_0 : i32, i32
  }
  func.func @transform_3(%arg0: i32) -> (i32, i32) {
    %c0_i32 = arith.constant 0 : i32
    %c0_i32_0 = arith.constant 0 : i32
    %c0_i32_1 = arith.constant 0 : i32
    return %c0_i32, %c0_i32_0 : i32, i32
  }
  func.func @transform_4(%arg0: i32) -> (i32, i32) {
    %c0_i32 = arith.constant 0 : i32
    %c0_i32_0 = arith.constant 0 : i32
    %c0_i32_1 = arith.constant 0 : i32
    return %c0_i32, %c0_i32_0 : i32, i32
  }
  func.func @transform_5(%arg0: i32) -> (i32, i32, i32) {
    %c0_i32 = arith.constant 0 : i32
    %c0_i32_0 = arith.constant 0 : i32
    %c0_i32_1 = arith.constant 0 : i32
    return %arg0, %c0_i32, %c0_i32_0 : i32, i32, i32
  }
}

</mosaic_0001>

<llo_original>
// kernel: tpu_custom_call.1
$region0: #{tpu_custom_call.1}
  #allocation0 [shape = 'u32[]', space=smem, size = 0x4, offset = 0x4, fixed_abs, tag = 'smem constant byte address 0x4 - core index']
  #allocation1 [shape = 'u32[144,128]{1,0:T(1,128)}', space=vmem, size = 0x12000, scoped, tag = 'internal scratch']
  %s0 = inlined_call_operand.hbm [shape: f32[2,4,256], index: 0, kind: input, shape index: {}]
  %s1 = inlined_call_operand.hbm [shape: f32[4,4], index: 1, kind: input, shape index: {}]
  %s2 = inlined_call_operand.vmem [shape: f32[1,4], index: 2, kind: input, shape index: {}]
  %s3 = inlined_call_operand.vmem [shape: f32[4,4], index: 3, kind: input, shape index: {}]
  %s4 = inlined_call_operand.vmem [shape: f32[1,4], index: 4, kind: input, shape index: {}]
  %s5 = inlined_call_operand.hbm [shape: f32[2,4,256], index: 5, kind: output, shape index: {}]
  %s6 = sld [smem:[#allocation0]]
  $region38: #{tpu_custom_call.1} parent=0
    _
  %s8 = ssub.s32 1, %s6
  %s9 = scalar_select 0, %s8, %s6
  $region1: #{tpu_custom_call.1} parent=0
    #allocation2 [shape = 'u8[8192]{0}', space=vmem, size = 0x2000, scoped, tag = 'input window, operand 0, single buffered']
    #allocation3 [shape = 's32[1]{0}', space=sflag, size = 0x4, scoped, tag = 'scoped memory for tpu_custom_call.1']
    #allocation4 [shape = 's32[1]{0}', space=sflag, size = 0x4, scoped, tag = 'scoped memory for tpu_custom_call.1']
    #allocation5 [shape = 'u8[2048]{0}', space=vmem, size = 0x800, scoped, tag = 'input window, operand 1, single buffered']
    #allocation6 [shape = 's32[1]{0}', space=sflag, size = 0x4, scoped, tag = 'scoped memory for tpu_custom_call.1']
    #allocation7 [shape = 'u8[8192]{0}', space=vmem, size = 0x2000, scoped, tag = 'output window, operand 0, single buffered']
    %10 = vsyncpa [#allocation3], 0
    %11 = vsyncpa [#allocation6], 0
    %12 = vsyncpa [#allocation4], 0
    // Predicated region
    $region2: #{tpu_custom_call.1} parent=1 // pred_check
      _
    $region3: #{tpu_custom_call.1} parent=1 // pred_check_branch
      %14 = sbr.rel (0) target = $region5
    $region4: #{tpu_custom_call.1} parent=1 // pred_region
      %s16 = ssub.s32 256, 256
      %17 = vsyncadd [#allocation3], %s16
      %s18 = sshll.u32 [#allocation2], 4
      %s19 = int_to_ptr.vmem [resolvable:$true] %s18
      %24 = dma.hbm_to_vmem [thread:$0]  %s0, 256, %s19, [#allocation3], 128, 128, 8
    $region5: #{tpu_custom_call.1} parent=1 // pred_fallthru
      _
    // Predicated region
    $region6: #{tpu_custom_call.1} parent=1 // pred_check
      _
    $region7: #{tpu_custom_call.1} parent=1 // pred_check_branch
      %26 = sbr.rel (0) target = $region9
    $region8: #{tpu_custom_call.1} parent=1 // pred_region
      %s28 = ssub.s32 64, 64
      %29 = vsyncadd [#allocation6], %s28
      %s31 = sshll.u32 [#allocation5], 4
      %s32 = int_to_ptr.vmem [resolvable:$true] %s31
      %34 = dma.hbm_to_vmem [thread:$0]  %s1, 64, %s32, [#allocation6]
    $region9: #{tpu_custom_call.1} parent=1 // pred_fallthru
      _
    // Predicated region
    $region10: #{tpu_custom_call.1} parent=1 // pred_check
      _
    $region11: #{tpu_custom_call.1} parent=1 // pred_check_branch
      %36 = sbr.rel (0) target = $region13
    $region12: #{tpu_custom_call.1} parent=1 // pred_region
      _
    $region13: #{tpu_custom_call.1} parent=1 // pred_fallthru
      _
    // Predicated region
    $region14: #{tpu_custom_call.1} parent=1 // pred_check
      _
    $region15: #{tpu_custom_call.1} parent=1 // pred_check_branch
      %38 = sbr.rel (0) target = $region17
    $region16: #{tpu_custom_call.1} parent=1 // pred_region
      _
    $region17: #{tpu_custom_call.1} parent=1 // pred_fallthru
      _
    // Predicated region
    $region18: #{tpu_custom_call.1} parent=1 // pred_check
      _
    $region19: #{tpu_custom_call.1} parent=1 // pred_check_branch
      %40 = sbr.rel (0) target = $region21
    $region20: #{tpu_custom_call.1} parent=1 // pred_region
      _
    $region21: #{tpu_custom_call.1} parent=1 // pred_fallthru
      _
    // Predicated region
    $region22: #{tpu_custom_call.1} parent=1 // pred_check
      _
    $region23: #{tpu_custom_call.1} parent=1 // pred_check_branch
      %42 = sbr.rel (0) target = $region25
    $region24: #{tpu_custom_call.1} parent=1 // pred_region
      %43 = dma.done [#allocation3], 256
    $region25: #{tpu_custom_call.1} parent=1 // pred_fallthru
      _
    // Predicated region
    $region26: #{tpu_custom_call.1} parent=1 // pred_check
      _
    $region27: #{tpu_custom_call.1} parent=1 // pred_check_branch
      %45 = sbr.rel (0) target = $region29
    $region28: #{tpu_custom_call.1} parent=1 // pred_region
      %46 = dma.done [#allocation6], 64
    $region29: #{tpu_custom_call.1} parent=1 // pred_fallthru
      _
    %v47 = vld [vmem:[#allocation2] sm:$0xff]
    %v48 = vld [vmem:[#allocation2 + $0x8] sm:$0xff]
    %v51 = vcombine.high %v47, %v47
    %v52 = vcombine.high %v48, %v48
    %vm55 = vcmask 1043456
    %v56 = vsel %vm55, %v47, 0.0
    %v57 = vsel %vm55, %v51, 0.0
    %v58 = vadd.f32 %v56, %v57
    %59 = vadd.xlane.f32.xlu0 %v58
    %v60 = vpop.xlane.xlu0 %59
    %v61 = vsel %vm55, %v48, 0.0
    %v62 = vsel %vm55, %v52, 0.0
    %v63 = vadd.f32 %v61, %v62
    %64 = vadd.xlane.f32.xlu0 %v63
    %v65 = vpop.xlane.xlu0 %64
    %v66 = vmul.f32 %v60, 0.00390625
    %v67 = vmul.f32 %v65, 0.00390625
    %v68 = vld [vmem:[#allocation5] sm:$0xf]
    %v69 = vld [vmem:[%s2] sm:$0x1]
    %v71 = vlaneseq
    %v72 = vshrl.u32 %v71, 7
    %v73 = vsub.s32 0, %v72
    %v74 = vrot.slane %v69, %v73
    %v78 = vlaneseq
    %v79 = vand.u32 %v78, 127
    %v80 = vlaneseq
    %v81 = vshrl.u32 %v80, 7
    %v82 = vsub.s32 %v79, %v81
    %v83 = vrot.slane %v66, %v82
    %v84 = vlaneseq
    %v85 = vshrl.u32 %v84, 7
    %v86 = vsub.s32 %v79, %v85
    %v87 = vrot.slane %v67, %v86
    %vm88 = vcmask 1041409
    %v89 = vsel %vm88, %v87, %v83
    %vm90 = vcmask 31744
    %v91 = vsel %vm90, %v89, 0
    %v94 = vsel %vm55, %v68, 0
    %96 = vmatprep.subr.mxu0 0.0
    %97 = vmatpush1.msra.mxu0 %v94
    %98 = vmatprep.subr.mxu0 0.0
    %99 = vmatpush1.msra.mxu0 0.0
    %100 = vmatprep.subr.mxu0 0.0
    %101 = vmatpush1.msra.mxu0 0.0
    %102 = vmatprep.subr.mxu0 0.0
    %103 = vmatpush1.msra.mxu0 0.0
    %104 = vmatprep.subr.mxu0 0.0
    %105 = vmatpush1.msra.mxu0 0.0
    %106 = vmatprep.subr.mxu0 0.0
    %107 = vmatpush1.msra.mxu0 0.0
    %108 = vmatprep.subr.mxu0 0.0
    %109 = vmatpush1.msra.mxu0 0.0
    %110 = vmatprep.subr.mxu0 0.0
    %111 = vmatpush1.msra.mxu0 0.0
    %112 = vmatprep.subr.mxu0 0.0
    %113 = vmatpush1.msra.mxu0 0.0
    %114 = vmatprep.subr.mxu0 0.0
    %115 = vmatpush1.msra.mxu0 0.0
    %116 = vmatprep.subr.mxu0 0.0
    %117 = vmatpush1.msra.mxu0 0.0
    %118 = vmatprep.subr.mxu0 0.0
    %119 = vmatpush1.msra.mxu0 0.0
    %120 = vmatprep.subr.mxu0 0.0
    %121 = vmatpush1.msra.mxu0 0.0
    %122 = vmatprep.subr.mxu0 0.0
    %123 = vmatpush1.msra.mxu0 0.0
    %124 = vmatprep.subr.mxu0 0.0
    %125 = vmatpush1.msra.mxu0 0.0
    %126 = vmatprep.subr.mxu0 0.0
    %127 = vmatpush1.msra.mxu0 0.0
    %128 = vmatprep.subr.mxu0 0.0
    %129 = vmatpush1.msra.mxu0 0.0
    %130 = vmatprep.subr.mxu0 0.0
    %131 = vmatpush1.msra.mxu0 0.0
    %132 = vmatprep.subr.mxu0 0.0
    %133 = vmatpush1.msra.mxu0 0.0
    %134 = vmatprep.subr.mxu0 0.0
    %135 = vmatpush1.msra.mxu0 0.0
    %136 = vmatprep.subr.mxu0 0.0
    %137 = vmatpush1.msra.mxu0 0.0
    %138 = vmatprep.subr.mxu0 0.0
    %139 = vmatpush1.msra.mxu0 0.0
    %140 = vmatprep.subr.mxu0 0.0
    %141 = vmatpush1.msra.mxu0 0.0
    %142 = vmatprep.subr.mxu0 0.0
    %143 = vmatpush1.msra.mxu0 0.0
    %144 = vmatprep.subr.mxu0 0.0
    %145 = vmatpush1.msra.mxu0 0.0
    %146 = vmatprep.subr.mxu0 0.0
    %147 = vmatpush1.msra.mxu0 0.0
    %148 = vmatprep.subr.mxu0 0.0
    %149 = vmatpush1.msra.mxu0 0.0
    %150 = vmatprep.subr.mxu0 0.0
    %151 = vmatpush1.msra.mxu0 0.0
    %152 = vmatprep.subr.mxu0 0.0
    %153 = vmatpush1.msra.mxu0 0.0
    %154 = vmatprep.subr.mxu0 0.0
    %155 = vmatpush1.msra.mxu0 0.0
    %156 = vmatprep.subr.mxu0 0.0
    %157 = vmatpush1.msra.mxu0 0.0
    %158 = vmatprep.subr.mxu0 0.0
    %159 = vmatpush1.msra.mxu0 0.0
    %160 = vmatprep.mubr.f32.mxu0 0.0
    %161 = vmatmul.mubr.f32.gmra.mrb[0].mxu0 %v91
    %v162 = vpop.f32.mrb[0].mxu0
    %v163 = vadd.f32 %v74, %v162
    %v164 = vpop.f32.mrb[0].mxu0
    %165 = vdwg.mxu0
    %v166 = vmax.f32 %v163, 0.0
    %v167 = vld [vmem:[%s3] sm:$0xf]
    %v168 = vld [vmem:[%s4] sm:$0x1]
    %v170 = vlaneseq
    %v171 = vshrl.u32 %v170, 7
    %v172 = vsub.s32 0, %v171
    %v173 = vrot.slane %v168, %v172
    %v176 = vsel %vm90, %v166, 0
    %v179 = vsel %vm55, %v167, 0
    %181 = vmatprep.subr.mxu0 0.0
    %182 = vmatpush1.msra.mxu0 %v179
    %183 = vmatprep.subr.mxu0 0.0
    %184 = vmatpush1.msra.mxu0 0.0
    %185 = vmatprep.subr.mxu0 0.0
    %186 = vmatpush1.msra.mxu0 0.0
    %187 = vmatprep.subr.mxu0 0.0
    %188 = vmatpush1.msra.mxu0 0.0
    %189 = vmatprep.subr.mxu0 0.0
    %190 = vmatpush1.msra.mxu0 0.0
    %191 = vmatprep.subr.mxu0 0.0
    %192 = vmatpush1.msra.mxu0 0.0
    %193 = vmatprep.subr.mxu0 0.0
    %194 = vmatpush1.msra.mxu0 0.0
    %195 = vmatprep.subr.mxu0 0.0
    %196 = vmatpush1.msra.mxu0 0.0
    %197 = vmatprep.subr.mxu0 0.0
    %198 = vmatpush1.msra.mxu0 0.0
    %199 = vmatprep.subr.mxu0 0.0
    %200 = vmatpush1.msra.mxu0 0.0
    %201 = vmatprep.subr.mxu0 0.0
    %202 = vmatpush1.msra.mxu0 0.0
    %203 = vmatprep.subr.mxu0 0.0
    %204 = vmatpush1.msra.mxu0 0.0
    %205 = vmatprep.subr.mxu0 0.0
    %206 = vmatpush1.msra.mxu0 0.0
    %207 = vmatprep.subr.mxu0 0.0
    %208 = vmatpush1.msra.mxu0 0.0
    %209 = vmatprep.subr.mxu0 0.0
    %210 = vmatpush1.msra.mxu0 0.0
    %211 = vmatprep.subr.mxu0 0.0
    %212 = vmatpush1.msra.mxu0 0.0
    %213 = vmatprep.subr.mxu0 0.0
    %214 = vmatpush1.msra.mxu0 0.0
    %215 = vmatprep.subr.mxu0 0.0
    %216 = vmatpush1.msra.mxu0 0.0
    %217 = vmatprep.subr.mxu0 0.0
    %218 = vmatpush1.msra.mxu0 0.0
    %219 = vmatprep.subr.mxu0 0.0
    %220 = vmatpush1.msra.mxu0 0.0
    %221 = vmatprep.subr.mxu0 0.0
    %222 = vmatpush1.msra.mxu0 0.0
    %223 = vmatprep.subr.mxu0 0.0
    %224 = vmatpush1.msra.mxu0 0.0
    %225 = vmatprep.subr.mxu0 0.0
    %226 = vmatpush1.msra.mxu0 0.0
    %227 = vmatprep.subr.mxu0 0.0
    %228 = vmatpush1.msra.mxu0 0.0
    %229 = vmatprep.subr.mxu0 0.0
    %230 = vmatpush1.msra.mxu0 0.0
    %231 = vmatprep.subr.mxu0 0.0
    %232 = vmatpush1.msra.mxu0 0.0
    %233 = vmatprep.subr.mxu0 0.0
    %234 = vmatpush1.msra.mxu0 0.0
    %235 = vmatprep.subr.mxu0 0.0
    %236 = vmatpush1.msra.mxu0 0.0
    %237 = vmatprep.subr.mxu0 0.0
    %238 = vmatpush1.msra.mxu0 0.0
    %239 = vmatprep.subr.mxu0 0.0
    %240 = vmatpush1.msra.mxu0 0.0
    %241 = vmatprep.subr.mxu0 0.0
    %242 = vmatpush1.msra.mxu0 0.0
    %243 = vmatprep.subr.mxu0 0.0
    %244 = vmatpush1.msra.mxu0 0.0
    %245 = vmatprep.mubr.f32.mxu0 0.0
    %246 = vmatmul.mubr.f32.gmra.mrb[0].mxu0 %v176
    %v247 = vpop.f32.mrb[0].mxu0
    %v248 = vadd.f32 %v173, %v247
    %v249 = vpop.f32.mrb[0].mxu0
    %250 = vdwg.mxu0
    %v251 = vxor.u32 %v248, 2147483648
    %v252 = vmul.f32 %v251, 1.442695
    %v253 = vpow.pop %v252
    %v254 = vadd.f32 %v253, 1.0
    %v255 = vrcp.pop %v254
    %v256 = vmul.f32 1.0, %v255
    %v257 = vlaneseq
    %v258 = vshrl.u32 %v257, 7
    %v259 = vsub.s32 0, %v258
    %v260 = vrot.slane %v256, %v259
    %262 = vbcast.lane.b32.xlu0 %v260, 256
    %v263 = vpop.permute.xlu0 %262
    %v264 = vlaneseq
    %v265 = vshrl.u32 %v264, 7
    %v266 = vsub.s32 1, %v265
    %v267 = vrot.slane %v256, %v266
    %269 = vbcast.lane.b32.xlu0 %v267, 256
    %v270 = vpop.permute.xlu0 %269
    %v274 = vunpack.c.l.s4 839922192
    %v275 = vunpack.c.0.s8 %v274
    %v276 = vlaneseq
    %v277 = vshrl.u32 %v276, 7
    %v278 = vsub.s32 %v275, %v277
    %v279 = vrot.slane %v263, %v278
    %v281 = vunpack.c.l.s4 839922192
    %v282 = vunpack.c.0.s8 %v281
    %v283 = vlaneseq
    %v284 = vshrl.u32 %v283, 7
    %v285 = vsub.s32 %v282, %v284
    %v286 = vrot.slane %v270, %v285
    %v289 = vmul.f32 %v47, %v279
    %v290 = vmul.f32 %v48, %v286
    %291 = vst [vmem:[#allocation7] sm:$0xff] %v289
    %292 = vst [vmem:[#allocation7 + $0x8] sm:$0xff] %v290
    // Predicated region
    $region30: #{tpu_custom_call.1} parent=1 // pred_check
      _
    $region31: #{tpu_custom_call.1} parent=1 // pred_check_branch
      %294 = sbr.rel (0) target = $region33
    $region32: #{tpu_custom_call.1} parent=1 // pred_region
      %s296 = ssub.s32 256, 256
      %297 = vsyncadd [#allocation4], %s296
      %s298 = sshll.u32 [#allocation7], 4
      %s299 = int_to_ptr.vmem [resolvable:$true] %s298
      %304 = dma.vmem_to_hbm [thread:$0]  %s299, 256, %s5, [#allocation4], 128, 128, 8
    $region33: #{tpu_custom_call.1} parent=1 // pred_fallthru
      _
    // Predicated region
    $region34: #{tpu_custom_call.1} parent=1 // pred_check
      _
    $region35: #{tpu_custom_call.1} parent=1 // pred_check_branch
      %306 = sbr.rel (0) target = $region37
    $region36: #{tpu_custom_call.1} parent=1 // pred_region
      %307 = dma.done [#allocation4], 256
    $region37: #{tpu_custom_call.1} parent=1 // pred_fallthru
      _
    %308 = vsyncpa [#allocation3], 1
    %309 = vsyncpa [#allocation6], 1
    %310 = vsyncpa [#allocation4], 1

</llo_original>
